<compile_context>
chip_gen: v7x
topology: tpu7x:2x2x1
jax: 0.10.0
libtpu: 0.0.40
codegen_flags: <defaults>
</compile_context>

<pallas_src>
import jax
import jax.numpy as jnp
from jax.experimental import pallas as pl
from jax.experimental.pallas import tpu as pltpu


def _round_up(x, m):
    return (x + m - 1) // m * m


def linear_kernel(x_ref, w_ref, b_ref, o_ref):
    """One streamed tile of y = x @ w + b.

    x_ref: (TR, W)  VMEM  -- streamed rows (batch rows, possibly lane-packed)
    w_ref: (G, W)   VMEM  -- resident weight rows (G=1 generic, G=128//D packed)
    b_ref: (1, 1)   SMEM  -- scalar bias
    o_ref: (G, TR)  VMEM  -- lane-dense output slab (batch on the lane axis)
    """
    acc = jax.lax.dot_general(
        w_ref[...], x_ref[...],
        dimension_numbers=(((1,), (1,)), ((), ())),   # contract over W (trans-b)
        preferred_element_type=jnp.float32)           # MXU, f32 accumulate
    o_ref[...] = (acc + b_ref[0, 0]).astype(o_ref.dtype)


def _choose_tile(n_rows, row_width, itemsize, tile_rows=None):
    """Row-tile size for streaming an (n_rows, row_width) array.

    Targets ~2 MiB of lane-padded bytes per pipeline buffer.  Multi-tile grids
    keep tile_rows % 128 == 0 so the (G, tile_rows) output slabs store with
    unmasked vst; a single tile uses the exact row count (full-extent block).
    Returns (tile_rows, n_rows_padded_to_tile).
    """
    width_pad = _round_up(row_width, 128)
    bytes_per_row = width_pad * itemsize
    if tile_rows is None:
        budget = 2 * 1024 * 1024                     # per buffer (double-buffered)
        tile_rows = max(8, budget // bytes_per_row)
        # v7x megacore: prefer >= 4 grid steps (2 per TensorCore) once each
        # tile can stay >= ~512 KiB.
        min_rows = max(128, (512 * 1024) // bytes_per_row)
        if n_rows >= 4 * min_rows:
            tile_rows = min(tile_rows, _round_up(pl.cdiv(n_rows, 4), 128))
    tile_rows = int(tile_rows)
    if tile_rows >= n_rows:
        return n_rows, n_rows                        # single full-extent tile
    tile_rows = _round_up(max(tile_rows, 8), 128)
    if tile_rows >= n_rows:
        return n_rows, n_rows
    return tile_rows, _round_up(n_rows, tile_rows)


def simple_model_forward(x, w, b, *, tile_rows=None):
    """y = x @ w + b with w (D, 1)/(D,)/(1, D) and bias b; returns (B, 1)."""
    B, D = x.shape
    itemsize = x.dtype.itemsize
    w_row = jnp.asarray(w, x.dtype).reshape(1, D)
    b_s = jnp.asarray(b, jnp.float32).reshape(1, 1)

    # Small-D packing: (B, D) -> (B*D/128, 128) is a free row-major reshape.
    G = 128 // D if (D < 128 and 128 % D == 0) else 1
    if G > 1 and B % G != 0:
        G = 1                     # padding here would copy all of x; not worth it
    if G > 1:
        xs = x.reshape(B // G, G * D)
        wk = jnp.kron(jnp.eye(G, dtype=x.dtype), w_row)   # (G, 128) block weight
    else:
        xs, wk = x, w_row

    n_rows, width = xs.shape
    tr, n_pad = _choose_tile(n_rows, width, itemsize, tile_rows)
    grid = (n_pad // tr,)

    # VMEM: 2 double-buffered x tiles + resident weight + output slabs.
    width_pad = _round_up(width, 128)
    vmem_need = (2 * tr * width_pad * itemsize
                 + 8 * width_pad * itemsize
                 + 2 * 8 * _round_up(tr, 128) * itemsize)
    vmem_limit = int(min(64 << 20, max(16 << 20, 2 * vmem_need)))
    # TODO(synk): for very large D (2 * 8 * D_pad * itemsize above the VMEM
    # budget) add a K-split "arbitrary" grid axis with an f32 row accumulator.

    out = pl.pallas_call(
        linear_kernel,
        out_shape=jax.ShapeDtypeStruct((G, n_pad), x.dtype),
        grid=grid,
        in_specs=[
            pl.BlockSpec((tr, width), lambda i: (i, 0)),        # streamed x tiles
            pl.BlockSpec((G, width), lambda i: (0, 0)),         # resident weight
            pl.BlockSpec(memory_space=pltpu.MemorySpace.SMEM),  # scalar bias
        ],
        out_specs=pl.BlockSpec((G, tr), lambda i: (0, i)),      # lane-dense output
        compiler_params=pltpu.CompilerParams(
            dimension_semantics=("parallel",),   # megacore split on v7x
            vmem_limit_bytes=vmem_limit,
        ),
        cost_estimate=pl.CostEstimate(
            flops=2 * B * D,
            transcendentals=0,
            bytes_accessed=(B * D + D + B + 1) * itemsize,
        ),
    )(xs, wk, b_s)

    if G > 1:
        return out[:, : B // G].T.reshape(B, 1)   # un-interleave packed rows
    return out[0, :B].reshape(B, 1)


if __name__ == "__main__":
    key = jax.random.PRNGKey(0)
    kx1, kx2, kx3, kx4, kw1, kb1, kw2, kb2 = jax.random.split(key, 8)

    def make_params(kw, kb, d):
        # nn.Linear-style init: uniform(-1/sqrt(fan_in), 1/sqrt(fan_in)).
        bound = 1.0 / (d ** 0.5)
        w = jax.random.uniform(kw, (d, 1), jnp.float32, -bound, bound)
        b = jax.random.uniform(kb, (1,), jnp.float32, -bound, bound)
        return w, b

    def check(x, w, b, **kw):
        y = simple_model_forward(x, w, b, **kw)
        jax.block_until_ready(y)
        y_ref = x @ w + b
        assert y.shape == (x.shape[0], 1), y.shape
        assert jnp.allclose(y, y_ref, atol=1e-4, rtol=1e-4), (
            float(jnp.max(jnp.abs(y - y_ref))))

    # SimpleModel(input_dim=32) at the spec's small shape (packed, single tile).
    D = 32
    w, b = make_params(kw1, kb1, D)
    check(jax.random.normal(kx1, (8, D), jnp.float32), w, b)

    # Packed path, multi-tile grid with a ragged last tile (no jnp.pad of x).
    check(jax.random.normal(kx2, (600, D), jnp.float32), w, b, tile_rows=128)

    # Generic path (B % 4 != 0 -> no packing), single full-extent tile.
    check(jax.random.normal(kx3, (10, D), jnp.float32), w, b)

    # Generic path (D >= 128), multi-tile grid with a ragged last tile.
    D2 = 160
    w2, b2 = make_params(kw2, kb2, D2)
    check(jax.random.normal(kx4, (300, D2), jnp.float32), w2, b2, tile_rows=128)

    print("KERNEL_OK")
</pallas_src>

<mosaic_0001>
module attributes {stable_mosaic.version = 11 : i64} {
  func.func @linear_kernel(%arg0: i32, %arg1: memref<2x128xf32, #tpu.memory_space<vmem>>, %arg2: memref<4x128xf32, #tpu.memory_space<vmem>>, %arg3: memref<1x1xf32, #tpu.memory_space<smem>>, %arg4: memref<4x2xf32, #tpu.memory_space<vmem>>) attributes {dimension_semantics = [#tpu.dimension_semantics<parallel>], iteration_bounds = array<i64: 1>, scalar_prefetch = 0 : i64, scratch_operands = 0 : i64, tpu.core_type = #tpu.core_type<tc>, window_params = [{transform_indices = @transform_0, window_bounds = array<i64: 2, 128>}, {pipeline_mode = #tpu.pipeline_mode<synchronous>, transform_indices = @transform_1, window_bounds = array<i64: 4, 128>}, {transform_indices = @transform_2, window_bounds = array<i64: 1, 1>}, {transform_indices = @transform_3, window_bounds = array<i64: 4, 2>}]} {
    %c0 = arith.constant 0 : index
    %c0_0 = arith.constant 0 : index
    %0 = vector.load %arg2[%c0, %c0_0] : memref<4x128xf32, #tpu.memory_space<vmem>>, vector<4x128xf32>
    %c0_1 = arith.constant 0 : index
    %c0_2 = arith.constant 0 : index
    %1 = vector.load %arg1[%c0_1, %c0_2] : memref<2x128xf32, #tpu.memory_space<vmem>>, vector<2x128xf32>
    %cst = arith.constant dense<0.000000e+00> : vector<4x2xf32>
    %2 = tpu.matmul %0, %1, %cst {dimension_numbers = #tpu.dot_dimension_numbers<[1], [1], [0], [0], [0, 0, 1, 0], [], []>} : vector<4x128xf32>, vector<2x128xf32>, vector<4x2xf32> -> vector<4x2xf32>
    %c0_3 = arith.constant 0 : index
    %c0_4 = arith.constant 0 : index
    %3 = memref.load %arg3[%c0_3, %c0_4] : memref<1x1xf32, #tpu.memory_space<smem>>
    %4 = vector.broadcast %3 : f32 to vector<4x2xf32>
    %5 = arith.addf %2, %4 : vector<4x2xf32>
    %c0_5 = arith.constant 0 : index
    %c0_6 = arith.constant 0 : index
    %6 = vector.load %arg4[%c0_5, %c0_6] : memref<4x2xf32, #tpu.memory_space<vmem>>, vector<4x2xf32>
    tpu.vector_store %arg4[%c0_5, %c0_6], %5 {strides = array<i32>} : memref<4x2xf32, #tpu.memory_space<vmem>>, vector<4x2xf32>,
    return
  }
  func.func @transform_0(%arg0: i32) -> (i32, i32) {
    %c0_i32 = arith.constant 0 : i32
    %c0_i32_0 = arith.constant 0 : i32
    return %arg0, %c0_i32 : i32, i32
  }
  func.func @transform_1(%arg0: i32) -> (i32, i32) {
    %c0_i32 = arith.constant 0 : i32
    %c0_i32_0 = arith.constant 0 : i32
    %c0_i32_1 = arith.constant 0 : i32
    return %c0_i32, %c0_i32_0 : i32, i32
  }
  func.func @transform_2(%arg0: i32) -> (i32, i32) {
    %c0_i32 = arith.constant 0 : i32
    %c0_i32_0 = arith.constant 0 : i32
    %c0_i32_1 = arith.constant 0 : i32
    return %c0_i32, %c0_i32_0 : i32, i32
  }
  func.func @transform_3(%arg0: i32) -> (i32, i32) {
    %c0_i32 = arith.constant 0 : i32
    %c0_i32_0 = arith.constant 0 : i32
    return %c0_i32, %arg0 : i32, i32
  }
}

</mosaic_0001>

<llo_original>
// kernel: tpu_custom_call.1
$region0: #{tpu_custom_call.1}
  #allocation0 [shape = 'u32[]', space=smem, size = 0x4, offset = 0x4, fixed_abs, tag = 'smem constant byte address 0x4 - core index']
  #allocation1 [shape = 'u32[144,128]{1,0:T(1,128)}', space=vmem, size = 0x12000, scoped, tag = 'internal scratch']
  #allocation2 [shape = 'f32[1,1]{1,0:T(1,128)S(6)}', space=smem, size = 0x200, scoped, tag = 'scoped memory for tpu_custom_call.1']
  %s0 = inlined_call_operand.vmem [shape: f32[2,128], index: 0, kind: input, shape index: {}]
  %s1 = inlined_call_operand.vmem [shape: f32[4,128], index: 1, kind: input, shape index: {}]
  %s2 = inlined_call_operand.<no memory space> [shape: f32[1,1], index: 2, kind: input, shape index: {}]
  %s3 = inlined_call_operand.vmem [shape: f32[4,2], index: 3, kind: output, shape index: {}]
  %s4 = sld [smem:[#allocation0]]
  $region22: #{tpu_custom_call.1} parent=0
    _
  %s6 = ssub.s32 1, %s4
  %s7 = scalar_select 0, %s6, %s4
  %8 = sst [smem:[#allocation2]] %s2
  // Predicated region
  $region2: #{tpu_custom_call.1} parent=0 // pred_check
    _
  $region3: #{tpu_custom_call.1} parent=0 // pred_check_branch
    %10 = sbr.rel (0) target = $region5
  $region4: #{tpu_custom_call.1} parent=0 // pred_region
    _
  $region5: #{tpu_custom_call.1} parent=0 // pred_fallthru
    _
  // Predicated region
  $region6: #{tpu_custom_call.1} parent=0 // pred_check
    _
  $region7: #{tpu_custom_call.1} parent=0 // pred_check_branch
    %12 = sbr.rel (0) target = $region9
  $region8: #{tpu_custom_call.1} parent=0 // pred_region
    _
  $region9: #{tpu_custom_call.1} parent=0 // pred_fallthru
    _
  // Predicated region
  $region10: #{tpu_custom_call.1} parent=0 // pred_check
    _
  $region11: #{tpu_custom_call.1} parent=0 // pred_check_branch
    %14 = sbr.rel (0) target = $region13
  $region12: #{tpu_custom_call.1} parent=0 // pred_region
    _
  $region13: #{tpu_custom_call.1} parent=0 // pred_fallthru
    _
  %v15 = vld [vmem:[%s1] sm:$0xf]
  %v16 = vld [vmem:[%s0] sm:$0x3]
  %s17 = sld [smem:[#allocation2]]
  %v18 = vstv %s17
  %19 = vmatprep.subr.mxu0 0.0
  %20 = vmatpush1.xpose.msra.mxu0 %v16
  %21 = vmatprep.subr.mxu0 0.0
  %22 = vmatpush1.xpose.msra.mxu0 0.0
  %23 = vmatprep.subr.mxu0 0.0
  %24 = vmatpush1.xpose.msra.mxu0 0.0
  %25 = vmatprep.subr.mxu0 0.0
  %26 = vmatpush1.xpose.msra.mxu0 0.0
  %27 = vmatprep.subr.mxu0 0.0
  %28 = vmatpush1.xpose.msra.mxu0 0.0
  %29 = vmatprep.subr.mxu0 0.0
  %30 = vmatpush1.xpose.msra.mxu0 0.0
  %31 = vmatprep.subr.mxu0 0.0
  %32 = vmatpush1.xpose.msra.mxu0 0.0
  %33 = vmatprep.subr.mxu0 0.0
  %34 = vmatpush1.xpose.msra.mxu0 0.0
  %35 = vmatprep.subr.mxu0 0.0
  %36 = vmatpush1.xpose.msra.mxu0 0.0
  %37 = vmatprep.subr.mxu0 0.0
  %38 = vmatpush1.xpose.msra.mxu0 0.0
  %39 = vmatprep.subr.mxu0 0.0
  %40 = vmatpush1.xpose.msra.mxu0 0.0
  %41 = vmatprep.subr.mxu0 0.0
  %42 = vmatpush1.xpose.msra.mxu0 0.0
  %43 = vmatprep.subr.mxu0 0.0
  %44 = vmatpush1.xpose.msra.mxu0 0.0
  %45 = vmatprep.subr.mxu0 0.0
  %46 = vmatpush1.xpose.msra.mxu0 0.0
  %47 = vmatprep.subr.mxu0 0.0
  %48 = vmatpush1.xpose.msra.mxu0 0.0
  %49 = vmatprep.subr.mxu0 0.0
  %50 = vmatpush1.xpose.msra.mxu0 0.0
  %51 = vmatprep.subr.mxu0 0.0
  %52 = vmatpush1.xpose.msra.mxu0 0.0
  %53 = vmatprep.subr.mxu0 0.0
  %54 = vmatpush1.xpose.msra.mxu0 0.0
  %55 = vmatprep.subr.mxu0 0.0
  %56 = vmatpush1.xpose.msra.mxu0 0.0
  %57 = vmatprep.subr.mxu0 0.0
  %58 = vmatpush1.xpose.msra.mxu0 0.0
  %59 = vmatprep.subr.mxu0 0.0
  %60 = vmatpush1.xpose.msra.mxu0 0.0
  %61 = vmatprep.subr.mxu0 0.0
  %62 = vmatpush1.xpose.msra.mxu0 0.0
  %63 = vmatprep.subr.mxu0 0.0
  %64 = vmatpush1.xpose.msra.mxu0 0.0
  %65 = vmatprep.subr.mxu0 0.0
  %66 = vmatpush1.xpose.msra.mxu0 0.0
  %67 = vmatprep.subr.mxu0 0.0
  %68 = vmatpush1.xpose.msra.mxu0 0.0
  %69 = vmatprep.subr.mxu0 0.0
  %70 = vmatpush1.xpose.msra.mxu0 0.0
  %71 = vmatprep.subr.mxu0 0.0
  %72 = vmatpush1.xpose.msra.mxu0 0.0
  %73 = vmatprep.subr.mxu0 0.0
  %74 = vmatpush1.xpose.msra.mxu0 0.0
  %75 = vmatprep.subr.mxu0 0.0
  %76 = vmatpush1.xpose.msra.mxu0 0.0
  %77 = vmatprep.subr.mxu0 0.0
  %78 = vmatpush1.xpose.msra.mxu0 0.0
  %79 = vmatprep.subr.mxu0 0.0
  %80 = vmatpush1.xpose.msra.mxu0 0.0
  %81 = vmatprep.subr.mxu0 0.0
  %82 = vmatpush1.xpose.msra.mxu0 0.0
  %83 = vmatprep.mubr.f32.mxu0 0.0
  %84 = vmatmul.mubr.f32.gmra.mrb[0].mxu0 %v15
  %v85 = vpop.f32.mrb[0].mxu0
  %v86 = vadd.f32 %v18, %v85
  %v87 = vpop.f32.mrb[0].mxu0
  %88 = vdwg.mxu0
  %vm89 = vcmask 11264
  %90 = vst.msk [vmem:[%s3] sm:$0xf] %vm89, %v86
  // Predicated region
  $region14: #{tpu_custom_call.1} parent=0 // pred_check
    _
  $region15: #{tpu_custom_call.1} parent=0 // pred_check_branch
    %92 = sbr.rel (0) target = $region17
  $region16: #{tpu_custom_call.1} parent=0 // pred_region
    _
  $region17: #{tpu_custom_call.1} parent=0 // pred_fallthru
    _
  // Predicated region
  $region18: #{tpu_custom_call.1} parent=0 // pred_check
    _
  $region19: #{tpu_custom_call.1} parent=0 // pred_check_branch
    %94 = sbr.rel (0) target = $region21
  $region20: #{tpu_custom_call.1} parent=0 // pred_region
    _
  $region21: #{tpu_custom_call.1} parent=0 // pred_fallthru
    _

</llo_original>
